<compile_context>
chip_gen: v6e
topology: v6e:2x2x1
jax: 0.10.0
libtpu: 0.0.40
codegen_flags: <defaults>
</compile_context>

<pallas_src>
import jax
import jax.numpy as jnp
from jax.experimental import pallas as pl
from jax.experimental.pallas import tpu as pltpu


STATE_DIM = 3
ACTION_DIM = 3
IN_DIM = STATE_DIM + ACTION_DIM
HIDDEN = 100        # matches self.hidden_feature_size = 100 in the PyTorch module
H_PAD = 128         # zero-padded hidden width (exact: ReLU(0)=0, padded rows/cols are 0)
TILE_B_MAX = 4096   # batch tile (lanes); capped so tiles also fit v7x's 64 MiB VMEM


def _default_epilogue_dtype():
    """bf16 epilogue on chips with a bf16-native VALU (v6e/v7x); f32 on v5e."""
    try:
        kind = jax.devices()[0].device_kind.lower()
    except Exception:
        return jnp.bfloat16
    return jnp.float32 if "v5" in kind else jnp.bfloat16


def residual_dynamics_kernel(x_ref, w1_ref, b1_ref, w2_ref, b2_ref, w3_ref, b3_ref,
                             out_ref):
    """One (features, TILE_B) batch slab, feature-major.

    x_ref  : (6, TB)  f32   -- rows 0..2 = state, rows 3..5 = action
    w1_ref : (128, 6) bf16    b1_ref: (128, 1) bf16/f32 (epilogue dtype)
    w2_ref : (128,128) bf16   b2_ref: (128, 1) bf16/f32
    w3_ref : (3, 128) bf16    b3_ref: (3, 1)   f32
    out_ref: (3, TB)  f32
    """
    x = x_ref[...]                                   # (6, TB) f32
    s = x[:STATE_DIM, :]                             # (3, TB) f32 residual (kept exact)

    # Layer 1: relu(W1 @ x + b1)   -- single fused K=6 MXU matmul
    h = jnp.dot(w1_ref[...], x.astype(jnp.bfloat16),
                preferred_element_type=jnp.float32)            # (128, TB) f32 accum
    h = jnp.maximum(h.astype(b1_ref.dtype) + b1_ref[...], 0)   # epilogue in b1 dtype
    h = h.astype(jnp.bfloat16)

    # Layer 2: relu(W2 @ h + b2)
    h = jnp.dot(w2_ref[...], h, preferred_element_type=jnp.float32)
    h = jnp.maximum(h.astype(b2_ref.dtype) + b2_ref[...], 0)
    h = h.astype(jnp.bfloat16)

    # Layer 3 + residual (f32)
    y = jnp.dot(w3_ref[...], h, preferred_element_type=jnp.float32)   # (3, TB) f32
    out_ref[...] = (y + b3_ref[...] + s).astype(out_ref.dtype)


def make_params(key, state_dim=STATE_DIM, action_dim=ACTION_DIM,
                hidden=HIDDEN, hidden_pad=H_PAD, epilogue_dtype=None):
    """Synthetic nn.Linear-style params.

    Returns (kernel_params, ref_params):
      ref_params   : f32, unpadded, weights stored (in, out) -- reference math.
      kernel_params: feature-major (out, in) weights, hidden zero-padded to 128,
                     matmul weights bf16, b1/b2 in the epilogue dtype, b3 f32,
                     biases stored as (out, 1) columns.
    """
    if epilogue_dtype is None:
        epilogue_dtype = _default_epilogue_dtype()
    in_dim = state_dim + action_dim
    k = jax.random.split(key, 6)

    def uniform(kk, shape, fan_in):
        bound = 1.0 / (float(fan_in) ** 0.5)
        return jax.random.uniform(kk, shape, jnp.float32, -bound, bound)

    w1 = uniform(k[0], (in_dim, hidden), in_dim)
    b1 = uniform(k[1], (hidden,), in_dim)
    w2 = uniform(k[2], (hidden, hidden), hidden)
    b2 = uniform(k[3], (hidden,), hidden)
    w3 = uniform(k[4], (hidden, state_dim), hidden)
    b3 = uniform(k[5], (state_dim,), hidden)
    ref_params = dict(w1=w1, b1=b1, w2=w2, b2=b2, w3=w3, b3=b3)

    hp = hidden_pad - hidden
    kernel_params = dict(
        w1t=jnp.pad(w1, ((0, 0), (0, hp))).T.astype(jnp.bfloat16),             # (128, 6)
        b1=jnp.pad(b1, (0, hp)).reshape(hidden_pad, 1).astype(epilogue_dtype),  # (128, 1)
        w2t=jnp.pad(w2, ((0, hp), (0, hp))).T.astype(jnp.bfloat16),            # (128, 128)
        b2=jnp.pad(b2, (0, hp)).reshape(hidden_pad, 1).astype(epilogue_dtype),  # (128, 1)
        w3t=jnp.pad(w3, ((0, hp), (0, 0))).T.astype(jnp.bfloat16),             # (3, 128)
        b3=b3.reshape(state_dim, 1).astype(jnp.float32),                        # (3, 1)
    )
    return kernel_params, ref_params


def _round_up(x, m):
    return ((x + m - 1) // m) * m


def _choose_tile_b(batch, tile_b_max=TILE_B_MAX):
    """Pick the batch tile: as large as possible (amortize per-grid-step overhead), but
    keep >= 2 grid steps when there is enough work so v7x megacore can split the axis."""
    if batch <= 512:
        return 512
    if batch >= 2 * tile_b_max:
        return tile_b_max
    return min(tile_b_max, _round_up(pl.cdiv(batch, 2), 512))


def residual_dynamics_forward(state, action, params, tile_b_max=TILE_B_MAX):
    """Flattens leading batch dims, runs the feature-major batch-tiled Pallas kernel
    and restores the original (..., state_dim) batch shape."""
    assert state.shape[-1] == STATE_DIM and action.shape[-1] == ACTION_DIM
    assert state.shape[:-1] == action.shape[:-1]
    batch_shape = state.shape[:-1]

    s2 = state.reshape(-1, STATE_DIM).astype(jnp.float32)
    a2 = action.reshape(-1, ACTION_DIM).astype(jnp.float32)
    B = s2.shape[0]

    # Feature-major, lane-dense layout: one (6, B) slab = [state ; action].
    x_t = jnp.concatenate([s2, a2], axis=-1).T                   # (6, B) f32

    tile_b = _choose_tile_b(B, tile_b_max)
    n_tiles = pl.cdiv(B, tile_b)   # no jnp.pad: Pallas clamps/masks the boundary block

    # Batch-tiled input/output slabs (lane-dense: last dim = tile_b, multiple of 128).
    x_spec = pl.BlockSpec((IN_DIM, tile_b), lambda i: (0, i))
    out_spec = pl.BlockSpec((STATE_DIM, tile_b), lambda i: (0, i))

    # Weights/biases: whole array, constant block index -> fetched once, VMEM-resident.
    def resident(shape):
        return pl.BlockSpec(shape, lambda i: (0, 0))

    flops = 2 * B * (IN_DIM * H_PAD + H_PAD * H_PAD + H_PAD * STATE_DIM)
    bytes_accessed = (
        B * IN_DIM * 4 + B * STATE_DIM * 4                          # input / output slabs
        + 2 * (H_PAD * IN_DIM + H_PAD * H_PAD + STATE_DIM * H_PAD)  # bf16 weights
        + 4 * (2 * H_PAD + STATE_DIM))                              # biases

    out_t = pl.pallas_call(
        residual_dynamics_kernel,
        out_shape=jax.ShapeDtypeStruct((STATE_DIM, B), jnp.float32),
        grid=(n_tiles,),
        in_specs=[
            x_spec,
            resident((H_PAD, IN_DIM)),      # w1t
            resident((H_PAD, 1)),           # b1
            resident((H_PAD, H_PAD)),       # w2t
            resident((H_PAD, 1)),           # b2
            resident((STATE_DIM, H_PAD)),   # w3t
            resident((STATE_DIM, 1)),       # b3
        ],
        out_specs=out_spec,
        compiler_params=pltpu.CompilerParams(
            dimension_semantics=("parallel",),   # v7x: shard batch tiles across both TCs
            vmem_limit_bytes=32 * 1024 * 1024,   # ~6-8 MiB used at TILE_B=4096
        ),
        cost_estimate=pl.CostEstimate(
            flops=int(flops), transcendentals=0, bytes_accessed=int(bytes_accessed)),
    )(x_t, params["w1t"], params["b1"], params["w2t"], params["b2"],
      params["w3t"], params["b3"])

    return out_t.T.reshape(*batch_shape, STATE_DIM)


def residual_dynamics_ref_f32(state, action, ref_params):
    """Pure-JAX f32 reference (exact PyTorch-module semantics)."""
    s = state.astype(jnp.float32)
    a = action.astype(jnp.float32)
    x = jnp.concatenate([s, a], axis=-1)
    h = jnp.maximum(x @ ref_params["w1"] + ref_params["b1"], 0.0)
    h = jnp.maximum(h @ ref_params["w2"] + ref_params["b2"], 0.0)
    return h @ ref_params["w3"] + ref_params["b3"] + s


def residual_dynamics_ref_kernel_numerics(state, action, params):
    """Pure-JAX reference with the SAME numerics as the kernel (bf16 matmul operands,
    f32 accumulation, epilogue in the dtype stored in params)."""
    batch_shape = state.shape[:-1]
    s2 = state.reshape(-1, STATE_DIM).astype(jnp.float32)
    a2 = action.reshape(-1, ACTION_DIM).astype(jnp.float32)
    x = jnp.concatenate([s2, a2], axis=-1).T              # (6, B)
    s = x[:STATE_DIM, :]

    def mm(w, v):
        return jnp.dot(w, v.astype(jnp.bfloat16), preferred_element_type=jnp.float32)

    h = mm(params["w1t"], x)
    h = jnp.maximum(h.astype(params["b1"].dtype) + params["b1"], 0).astype(jnp.bfloat16)
    h = mm(params["w2t"], h)
    h = jnp.maximum(h.astype(params["b2"].dtype) + params["b2"], 0).astype(jnp.bfloat16)
    y = mm(params["w3t"], h) + params["b3"] + s
    return y.T.reshape(*batch_shape, STATE_DIM)


if __name__ == "__main__":
    key = jax.random.PRNGKey(0)
    kp, ks, ka = jax.random.split(key, 3)

    params, ref_params = make_params(kp)

    # Small example: batch shape (2, 8), like (traj, time) batching.
    state = jax.random.normal(ks, (2, 8, STATE_DIM), jnp.float32)
    action = jax.random.normal(ka, (2, 8, ACTION_DIM), jnp.float32)

    out = jax.block_until_ready(residual_dynamics_forward(state, action, params))
    assert out.shape == (2, 8, STATE_DIM), out.shape

    # Check vs. a reference using the same numerics as the kernel.
    ref_k = residual_dynamics_ref_kernel_numerics(state, action, params)
    assert jnp.allclose(out, ref_k, atol=2e-2, rtol=2e-2), "mismatch vs kernel-numerics ref"

    # Loose check vs. exact f32 module semantics (bf16 quantization error only).
    ref32 = residual_dynamics_ref_f32(state, action, ref_params)
    assert jnp.allclose(out, ref32, atol=1e-1, rtol=1e-1), "mismatch vs f32 reference"

    # Exercise multi-tile grid + non-multiple batch (B = 1300, no wrapper-side padding).
    ks2, ka2 = jax.random.split(jax.random.PRNGKey(1))
    state2 = jax.random.normal(ks2, (1300, STATE_DIM), jnp.float32)
    action2 = jax.random.normal(ka2, (1300, ACTION_DIM), jnp.float32)
    out2 = jax.block_until_ready(residual_dynamics_forward(state2, action2, params))
    ref2 = residual_dynamics_ref_kernel_numerics(state2, action2, params)
    assert out2.shape == (1300, STATE_DIM), out2.shape
    assert jnp.allclose(out2, ref2, atol=2e-2, rtol=2e-2), "mismatch on multi-tile batch"

    print("KERNEL_OK")
</pallas_src>

<mosaic_0001>
module attributes {stable_mosaic.version = 11 : i64} {
  func.func @residual_dynamics_kernel(%arg0: i32, %arg1: memref<6x512xf32, #tpu.memory_space<vmem>>, %arg2: memref<128x6xbf16, #tpu.memory_space<vmem>>, %arg3: memref<128x1xbf16, #tpu.memory_space<vmem>>, %arg4: memref<128x128xbf16, #tpu.memory_space<vmem>>, %arg5: memref<128x1xbf16, #tpu.memory_space<vmem>>, %arg6: memref<3x128xbf16, #tpu.memory_space<vmem>>, %arg7: memref<3x1xf32, #tpu.memory_space<vmem>>, %arg8: memref<3x512xf32, #tpu.memory_space<vmem>>) attributes {dimension_semantics = [#tpu.dimension_semantics<parallel>], iteration_bounds = array<i64: 1>, scalar_prefetch = 0 : i64, scratch_operands = 0 : i64, tpu.core_type = #tpu.core_type<tc>, window_params = [{transform_indices = @transform_0, window_bounds = array<i64: 6, 512>}, {pipeline_mode = #tpu.pipeline_mode<synchronous>, transform_indices = @transform_1, window_bounds = array<i64: 128, 6>}, {pipeline_mode = #tpu.pipeline_mode<synchronous>, transform_indices = @transform_2, window_bounds = array<i64: 128, 1>}, {pipeline_mode = #tpu.pipeline_mode<synchronous>, transform_indices = @transform_3, window_bounds = array<i64: 128, 128>}, {pipeline_mode = #tpu.pipeline_mode<synchronous>, transform_indices = @transform_4, window_bounds = array<i64: 128, 1>}, {pipeline_mode = #tpu.pipeline_mode<synchronous>, transform_indices = @transform_5, window_bounds = array<i64: 3, 128>}, {pipeline_mode = #tpu.pipeline_mode<synchronous>, transform_indices = @transform_6, window_bounds = array<i64: 3, 1>}, {transform_indices = @transform_7, window_bounds = array<i64: 3, 512>}]} {
    %c0 = arith.constant 0 : index
    %c0_0 = arith.constant 0 : index
    %0 = vector.load %arg1[%c0, %c0_0] : memref<6x512xf32, #tpu.memory_space<vmem>>, vector<6x512xf32>
    %1 = vector.extract_strided_slice %0 {offsets = [0, 0], sizes = [3, 512], strides = [1, 1]} : vector<6x512xf32> to vector<3x512xf32>
    %c0_1 = arith.constant 0 : index
    %c0_2 = arith.constant 0 : index
    %2 = vector.load %arg2[%c0_1, %c0_2] : memref<128x6xbf16, #tpu.memory_space<vmem>>, vector<128x6xbf16>
    %3 = arith.truncf %0 : vector<6x512xf32> to vector<6x512xbf16>
    %cst = arith.constant dense<0.000000e+00> : vector<128x512xf32>
    %4 = tpu.matmul %2, %3, %cst {dimension_numbers = #tpu.dot_dimension_numbers<[1], [0], [0], [1], [0, 0, 1, 1], [], []>} : vector<128x6xbf16>, vector<6x512xbf16>, vector<128x512xf32> -> vector<128x512xf32>
    %5 = arith.truncf %4 : vector<128x512xf32> to vector<128x512xbf16>
    %c0_3 = arith.constant 0 : index
    %c0_4 = arith.constant 0 : index
    %6 = vector.load %arg3[%c0_3, %c0_4] : memref<128x1xbf16, #tpu.memory_space<vmem>>, vector<128x1xbf16>
    %7 = vector.broadcast %6 : vector<128x1xbf16> to vector<128x512xbf16>
    %8 = arith.addf %5, %7 : vector<128x512xbf16>
    %cst_5 = arith.constant 0.000000e+00 : bf16
    %9 = vector.broadcast %cst_5 : bf16 to vector<128x512xbf16>
    %10 = arith.maximumf %8, %9 : vector<128x512xbf16>
    %c0_6 = arith.constant 0 : index
    %c0_7 = arith.constant 0 : index
    %11 = vector.load %arg4[%c0_6, %c0_7] : memref<128x128xbf16, #tpu.memory_space<vmem>>, vector<128x128xbf16>
    %cst_8 = arith.constant dense<0.000000e+00> : vector<128x512xf32>
    %12 = tpu.matmul %11, %10, %cst_8 {dimension_numbers = #tpu.dot_dimension_numbers<[1], [0], [0], [1], [0, 0, 1, 1], [], []>} : vector<128x128xbf16>, vector<128x512xbf16>, vector<128x512xf32> -> vector<128x512xf32>
    %13 = arith.truncf %12 : vector<128x512xf32> to vector<128x512xbf16>
    %c0_9 = arith.constant 0 : index
    %c0_10 = arith.constant 0 : index
    %14 = vector.load %arg5[%c0_9, %c0_10] : memref<128x1xbf16, #tpu.memory_space<vmem>>, vector<128x1xbf16>
    %15 = vector.broadcast %14 : vector<128x1xbf16> to vector<128x512xbf16>
    %16 = arith.addf %13, %15 : vector<128x512xbf16>
    %cst_11 = arith.constant 0.000000e+00 : bf16
    %17 = vector.broadcast %cst_11 : bf16 to vector<128x512xbf16>
    %18 = arith.maximumf %16, %17 : vector<128x512xbf16>
    %c0_12 = arith.constant 0 : index
    %c0_13 = arith.constant 0 : index
    %19 = vector.load %arg6[%c0_12, %c0_13] : memref<3x128xbf16, #tpu.memory_space<vmem>>, vector<3x128xbf16>
    %cst_14 = arith.constant dense<0.000000e+00> : vector<3x512xf32>
    %20 = tpu.matmul %19, %18, %cst_14 {dimension_numbers = #tpu.dot_dimension_numbers<[1], [0], [0], [1], [0, 0, 1, 1], [], []>} : vector<3x128xbf16>, vector<128x512xbf16>, vector<3x512xf32> -> vector<3x512xf32>
    %c0_15 = arith.constant 0 : index
    %c0_16 = arith.constant 0 : index
    %21 = vector.load %arg7[%c0_15, %c0_16] : memref<3x1xf32, #tpu.memory_space<vmem>>, vector<3x1xf32>
    %22 = vector.broadcast %21 : vector<3x1xf32> to vector<3x512xf32>
    %23 = arith.addf %20, %22 : vector<3x512xf32>
    %24 = arith.addf %23, %1 : vector<3x512xf32>
    %c0_17 = arith.constant 0 : index
    %c0_18 = arith.constant 0 : index
    %25 = vector.load %arg8[%c0_17, %c0_18] : memref<3x512xf32, #tpu.memory_space<vmem>>, vector<3x512xf32>
    tpu.vector_store %arg8[%c0_17, %c0_18], %24 {strides = array<i32>} : memref<3x512xf32, #tpu.memory_space<vmem>>, vector<3x512xf32>,
    return
  }
  func.func @transform_0(%arg0: i32) -> (i32, i32) {
    %c0_i32 = arith.constant 0 : i32
    %c0_i32_0 = arith.constant 0 : i32
    return %c0_i32, %arg0 : i32, i32
  }
  func.func @transform_1(%arg0: i32) -> (i32, i32) {
    %c0_i32 = arith.constant 0 : i32
    %c0_i32_0 = arith.constant 0 : i32
    %c0_i32_1 = arith.constant 0 : i32
    return %c0_i32, %c0_i32_0 : i32, i32
  }
  func.func @transform_2(%arg0: i32) -> (i32, i32) {
    %c0_i32 = arith.constant 0 : i32
    %c0_i32_0 = arith.constant 0 : i32
    %c0_i32_1 = arith.constant 0 : i32
    return %c0_i32, %c0_i32_0 : i32, i32
  }
  func.func @transform_3(%arg0: i32) -> (i32, i32) {
    %c0_i32 = arith.constant 0 : i32
    %c0_i32_0 = arith.constant 0 : i32
    %c0_i32_1 = arith.constant 0 : i32
    return %c0_i32, %c0_i32_0 : i32, i32
  }
  func.func @transform_4(%arg0: i32) -> (i32, i32) {
    %c0_i32 = arith.constant 0 : i32
    %c0_i32_0 = arith.constant 0 : i32
    %c0_i32_1 = arith.constant 0 : i32
    return %c0_i32, %c0_i32_0 : i32, i32
  }
  func.func @transform_5(%arg0: i32) -> (i32, i32) {
    %c0_i32 = arith.constant 0 : i32
    %c0_i32_0 = arith.constant 0 : i32
    %c0_i32_1 = arith.constant 0 : i32
    return %c0_i32, %c0_i32_0 : i32, i32
  }
  func.func @transform_6(%arg0: i32) -> (i32, i32) {
    %c0_i32 = arith.constant 0 : i32
    %c0_i32_0 = arith.constant 0 : i32
    %c0_i32_1 = arith.constant 0 : i32
    return %c0_i32, %c0_i32_0 : i32, i32
  }
  func.func @transform_7(%arg0: i32) -> (i32, i32) {
    %c0_i32 = arith.constant 0 : i32
    %c0_i32_0 = arith.constant 0 : i32
    return %c0_i32, %arg0 : i32, i32
  }
}

</mosaic_0001>

<llo_original>
// kernel: tpu_custom_call.1
$region0: #{tpu_custom_call.1}
  #allocation0 [shape = 'u32[]', space=smem, size = 0x4, offset = 0x4, fixed_abs, tag = 'smem constant byte address 0x4 - core index']
  #allocation1 [shape = 'u32[144,128]{1,0:T(1,128)}', space=vmem, size = 0x12000, scoped, tag = 'internal scratch']
  %s0 = inlined_call_operand.vmem [shape: f32[6,16], index: 0, kind: input, shape index: {}]
  %s1 = inlined_call_operand.vmem [shape: bf16[128,6], index: 1, kind: input, shape index: {}]
  %s2 = inlined_call_operand.vmem [shape: bf16[128,1], index: 2, kind: input, shape index: {}]
  %s3 = inlined_call_operand.vmem [shape: bf16[128,128], index: 3, kind: input, shape index: {}]
  %s4 = inlined_call_operand.vmem [shape: bf16[128,1], index: 4, kind: input, shape index: {}]
  %s5 = inlined_call_operand.vmem [shape: bf16[3,128], index: 5, kind: input, shape index: {}]
  %s6 = inlined_call_operand.vmem [shape: f32[3,1], index: 6, kind: input, shape index: {}]
  %s7 = inlined_call_operand.hbm [shape: f32[3,16], index: 7, kind: output, shape index: {}]
  %s8 = sld [smem:[#allocation0]]
  $region38: #{tpu_custom_call.1} parent=0
    _
  %s10 = ssub.s32 1, %s8
  %s11 = scalar_select 0, %s10, %s8
  $region1: #{tpu_custom_call.1} parent=0
    #allocation2 [shape = 'u8[8192]{0}', space=vmem, size = 0x2000, scoped, tag = 'output window, operand 0, single buffered']
    #allocation3 [shape = 's32[1]{0}', space=sflag, size = 0x4, scoped, tag = 'scoped memory for tpu_custom_call.1']
    %12 = vsyncpa [#allocation3], 0
    // Predicated region
    $region2: #{tpu_custom_call.1} parent=1 // pred_check
      _
    $region3: #{tpu_custom_call.1} parent=1 // pred_check_branch
      %14 = sbr.rel (0) target = $region5
    $region4: #{tpu_custom_call.1} parent=1 // pred_region
      _
    $region5: #{tpu_custom_call.1} parent=1 // pred_fallthru
      _
    // Predicated region
    $region6: #{tpu_custom_call.1} parent=1 // pred_check
      _
    $region7: #{tpu_custom_call.1} parent=1 // pred_check_branch
      %16 = sbr.rel (0) target = $region9
    $region8: #{tpu_custom_call.1} parent=1 // pred_region
      _
    $region9: #{tpu_custom_call.1} parent=1 // pred_fallthru
      _
    // Predicated region
    $region10: #{tpu_custom_call.1} parent=1 // pred_check
      _
    $region11: #{tpu_custom_call.1} parent=1 // pred_check_branch
      %18 = sbr.rel (0) target = $region13
    $region12: #{tpu_custom_call.1} parent=1 // pred_region
      _
    $region13: #{tpu_custom_call.1} parent=1 // pred_fallthru
      _
    // Predicated region
    $region14: #{tpu_custom_call.1} parent=1 // pred_check
      _
    $region15: #{tpu_custom_call.1} parent=1 // pred_check_branch
      %20 = sbr.rel (0) target = $region17
    $region16: #{tpu_custom_call.1} parent=1 // pred_region
      _
    $region17: #{tpu_custom_call.1} parent=1 // pred_fallthru
      _
    // Predicated region
    $region18: #{tpu_custom_call.1} parent=1 // pred_check
      _
    $region19: #{tpu_custom_call.1} parent=1 // pred_check_branch
      %22 = sbr.rel (0) target = $region21
    $region20: #{tpu_custom_call.1} parent=1 // pred_region
      _
    $region21: #{tpu_custom_call.1} parent=1 // pred_fallthru
      _
    // Predicated region
    $region22: #{tpu_custom_call.1} parent=1 // pred_check
      _
    $region23: #{tpu_custom_call.1} parent=1 // pred_check_branch
      %24 = sbr.rel (0) target = $region25
    $region24: #{tpu_custom_call.1} parent=1 // pred_region
      _
    $region25: #{tpu_custom_call.1} parent=1 // pred_fallthru
      _
    // Predicated region
    $region26: #{tpu_custom_call.1} parent=1 // pred_check
      _
    $region27: #{tpu_custom_call.1} parent=1 // pred_check_branch
      %26 = sbr.rel (0) target = $region29
    $region28: #{tpu_custom_call.1} parent=1 // pred_region
      _
    $region29: #{tpu_custom_call.1} parent=1 // pred_fallthru
      _
    %v28 = vld [vmem:[%s0] sm:$0x3f]
    %v29 = vld [vmem:[%s0 + $0x8] sm:$0x3f]
    %v30 = vld [vmem:[%s0 + $0x10] sm:$0x3f]
    %v31 = vld [vmem:[%s0 + $0x18] sm:$0x3f]
    %v32 = vld [vmem:[%s1] sm:$0xf]
    %v33 = vld [vmem:[%s1 + $0x4] sm:$0xf]
    %v34 = vld [vmem:[%s1 + $0x8] sm:$0xf]
    %v35 = vld [vmem:[%s1 + $0xc] sm:$0xf]
    %v36 = vld [vmem:[%s1 + $0x10] sm:$0xf]
    %v37 = vld [vmem:[%s1 + $0x14] sm:$0xf]
    %v38 = vld [vmem:[%s1 + $0x18] sm:$0xf]
    %v39 = vld [vmem:[%s1 + $0x1c] sm:$0xf]
    %v40 = vld [vmem:[%s1 + $0x20] sm:$0xf]
    %v41 = vld [vmem:[%s1 + $0x24] sm:$0xf]
    %v42 = vld [vmem:[%s1 + $0x28] sm:$0xf]
    %v43 = vld [vmem:[%s1 + $0x2c] sm:$0xf]
    %v44 = vld [vmem:[%s1 + $0x30] sm:$0xf]
    %v45 = vld [vmem:[%s1 + $0x34] sm:$0xf]
    %v46 = vld [vmem:[%s1 + $0x38] sm:$0xf]
    %v47 = vld [vmem:[%s1 + $0x3c] sm:$0xf]
    %v48 = vpack.c.bf16 %v28, %v28
    %v49 = vpack.c.bf16 %v29, %v29
    %v50 = vpack.c.bf16 %v30, %v30
    %v51 = vpack.c.bf16 %v31, %v31
    %v68 = vunpack.c.l.b16 %v32
    %v69 = vunpack.c.l.b16 %v33
    %v70 = vunpack.c.l.b16 %v34
    %v71 = vunpack.c.l.b16 %v35
    %v72 = vunpack.c.l.b16 %v36
    %v73 = vunpack.c.l.b16 %v37
    %v74 = vunpack.c.l.b16 %v38
    %v75 = vunpack.c.l.b16 %v39
    %v76 = vunpack.c.l.b16 %v40
    %v77 = vunpack.c.l.b16 %v41
    %v78 = vunpack.c.l.b16 %v42
    %v79 = vunpack.c.l.b16 %v43
    %v80 = vunpack.c.l.b16 %v44
    %v81 = vunpack.c.l.b16 %v45
    %v82 = vunpack.c.l.b16 %v46
    %v83 = vunpack.c.l.b16 %v47
    %v84 = vpack.c.b16 %v69, %v68
    %v85 = vpack.c.b16 %v71, %v70
    %v86 = vpack.c.b16 %v73, %v72
    %v87 = vpack.c.b16 %v75, %v74
    %v88 = vpack.c.b16 %v77, %v76
    %v89 = vpack.c.b16 %v79, %v78
    %v90 = vpack.c.b16 %v81, %v80
    %v91 = vpack.c.b16 %v83, %v82
    %vm92 = vcmask 48128
    %v94 = vsel %vm92, %v84, 0
    %v97 = vsel %vm92, %v85, 0
    %v100 = vsel %vm92, %v86, 0
    %v103 = vsel %vm92, %v87, 0
    %v106 = vsel %vm92, %v88, 0
    %v109 = vsel %vm92, %v89, 0
    %v112 = vsel %vm92, %v90, 0
    %v115 = vsel %vm92, %v91, 0
    %vm117 = vcmask 1042432
    %v119 = vsel %vm117, %v48, 0
    %v122 = vsel %vm117, %v49, 0
    %v125 = vsel %vm117, %v50, 0
    %v128 = vsel %vm117, %v51, 0
    %130 = vmatprep.subr.bf16.mxu0 0
    %131 = vmatpush1.bf16.msra.mxu0 0
    %132 = vmatprep.subr.bf16.mxu0 0
    %133 = vmatpush1.bf16.msra.mxu0 0
    %134 = vmatprep.subr.bf16.mxu0 0
    %135 = vmatpush1.bf16.msra.mxu0 0
    %136 = vmatprep.subr.bf16.mxu0 0
    %137 = vmatpush1.bf16.msra.mxu0 0
    %138 = vmatprep.subr.bf16.mxu0 0
    %139 = vmatpush1.bf16.msra.mxu0 0
    %140 = vmatprep.subr.bf16.mxu0 0
    %141 = vmatpush1.bf16.msra.mxu0 0
    %142 = vmatprep.subr.bf16.mxu0 0
    %143 = vmatpush1.bf16.msra.mxu0 0
    %144 = vmatprep.subr.bf16.mxu0 %v122
    %145 = vmatpush1.bf16.msra.mxu0 %v119
    %146 = vmatprep.subr.bf16.mxu0 0
    %147 = vmatpush2.bf16.msra.mxu0 0
    %148 = vmatprep.subr.bf16.mxu0 0
    %149 = vmatpush2.bf16.msra.mxu0 0
    %150 = vmatprep.subr.bf16.mxu0 0
    %151 = vmatpush2.bf16.msra.mxu0 0
    %152 = vmatprep.subr.bf16.mxu0 0
    %153 = vmatpush2.bf16.msra.mxu0 0
    %154 = vmatprep.subr.bf16.mxu0 0
    %155 = vmatpush2.bf16.msra.mxu0 0
    %156 = vmatprep.subr.bf16.mxu0 0
    %157 = vmatpush2.bf16.msra.mxu0 0
    %158 = vmatprep.subr.bf16.mxu0 0
    %159 = vmatpush2.bf16.msra.mxu0 0
    %160 = vmatprep.subr.bf16.mxu0 0
    %161 = vmatpush2.bf16.msra.mxu0 0
    %162 = vmatprep.mubr.bf16.mxu0 0
    %163 = vmatmul.mubr.bf16.gmra.mxu0 %v94
    %v164 = vpop.f32.mrf.mxu0
    %v165 = vadd.f32 0.0, %v164
    %v166 = vpop.f32.mrf.mxu0
    %v167 = vadd.f32 0.0, %v166
    %v168 = vpop.f32.mrf.mxu0
    %v169 = vadd.f32 0.0, %v168
    %v170 = vpop.f32.mrf.mxu0
    %v171 = vadd.f32 0.0, %v170
    %172 = vmatprep.mubr.bf16.mxu0 0
    %173 = vmatmul.mubr.bf16.gmra.mxu0 %v97
    %v174 = vpop.f32.mrf.mxu0
    %v175 = vadd.f32 0.0, %v174
    %v176 = vpop.f32.mrf.mxu0
    %v177 = vadd.f32 0.0, %v176
    %v178 = vpop.f32.mrf.mxu0
    %v179 = vadd.f32 0.0, %v178
    %v180 = vpop.f32.mrf.mxu0
    %v181 = vadd.f32 0.0, %v180
    %182 = vmatprep.mubr.bf16.mxu0 0
    %183 = vmatmul.mubr.bf16.gmra.mxu0 %v100
    %v184 = vpop.f32.mrf.mxu0
    %v185 = vadd.f32 0.0, %v184
    %v186 = vpop.f32.mrf.mxu0
    %v187 = vadd.f32 0.0, %v186
    %v188 = vpop.f32.mrf.mxu0
    %v189 = vadd.f32 0.0, %v188
    %v190 = vpop.f32.mrf.mxu0
    %v191 = vadd.f32 0.0, %v190
    %192 = vmatprep.mubr.bf16.mxu0 0
    %193 = vmatmul.mubr.bf16.gmra.mxu0 %v103
    %v194 = vpop.f32.mrf.mxu0
    %v195 = vadd.f32 0.0, %v194
    %v196 = vpop.f32.mrf.mxu0
    %v197 = vadd.f32 0.0, %v196
    %v198 = vpop.f32.mrf.mxu0
    %v199 = vadd.f32 0.0, %v198
    %v200 = vpop.f32.mrf.mxu0
    %v201 = vadd.f32 0.0, %v200
    %202 = vmatprep.mubr.bf16.mxu0 0
    %203 = vmatmul.mubr.bf16.gmra.mxu0 %v106
    %v204 = vpop.f32.mrf.mxu0
    %v205 = vadd.f32 0.0, %v204
    %v206 = vpop.f32.mrf.mxu0
    %v207 = vadd.f32 0.0, %v206
    %v208 = vpop.f32.mrf.mxu0
    %v209 = vadd.f32 0.0, %v208
    %v210 = vpop.f32.mrf.mxu0
    %v211 = vadd.f32 0.0, %v210
    %212 = vmatprep.mubr.bf16.mxu0 0
    %213 = vmatmul.mubr.bf16.gmra.mxu0 %v109
    %v214 = vpop.f32.mrf.mxu0
    %v215 = vadd.f32 0.0, %v214
    %v216 = vpop.f32.mrf.mxu0
    %v217 = vadd.f32 0.0, %v216
    %v218 = vpop.f32.mrf.mxu0
    %v219 = vadd.f32 0.0, %v218
    %v220 = vpop.f32.mrf.mxu0
    %v221 = vadd.f32 0.0, %v220
    %222 = vmatprep.mubr.bf16.mxu0 0
    %223 = vmatmul.mubr.bf16.gmra.mxu0 %v112
    %v224 = vpop.f32.mrf.mxu0
    %v225 = vadd.f32 0.0, %v224
    %v226 = vpop.f32.mrf.mxu0
    %v227 = vadd.f32 0.0, %v226
    %v228 = vpop.f32.mrf.mxu0
    %v229 = vadd.f32 0.0, %v228
    %v230 = vpop.f32.mrf.mxu0
    %v231 = vadd.f32 0.0, %v230
    %232 = vmatprep.mubr.bf16.mxu0 0
    %233 = vmatmul.mubr.bf16.gmra.mxu0 %v115
    %v234 = vpop.f32.mrf.mxu0
    %v235 = vadd.f32 0.0, %v234
    %v236 = vpop.f32.mrf.mxu0
    %v237 = vadd.f32 0.0, %v236
    %v238 = vpop.f32.mrf.mxu0
    %v239 = vadd.f32 0.0, %v238
    %v240 = vpop.f32.mrf.mxu0
    %v241 = vadd.f32 0.0, %v240
    %242 = vdwg.mxu0
    %243 = vmatprep.subr.bf16.mxu0 0
    %244 = vmatpush1.bf16.msra.mxu0 0
    %245 = vmatprep.subr.bf16.mxu0 0
    %246 = vmatpush1.bf16.msra.mxu0 0
    %247 = vmatprep.subr.bf16.mxu0 0
    %248 = vmatpush1.bf16.msra.mxu0 0
    %249 = vmatprep.subr.bf16.mxu0 0
    %250 = vmatpush1.bf16.msra.mxu0 0
    %251 = vmatprep.subr.bf16.mxu0 0
    %252 = vmatpush1.bf16.msra.mxu0 0
    %253 = vmatprep.subr.bf16.mxu0 0
    %254 = vmatpush1.bf16.msra.mxu0 0
    %255 = vmatprep.subr.bf16.mxu0 0
    %256 = vmatpush1.bf16.msra.mxu0 0
    %257 = vmatprep.subr.bf16.mxu0 %v128
    %258 = vmatpush1.bf16.msra.mxu0 %v125
    %259 = vmatprep.subr.bf16.mxu0 0
    %260 = vmatpush2.bf16.msra.mxu0 0
    %261 = vmatprep.subr.bf16.mxu0 0
    %262 = vmatpush2.bf16.msra.mxu0 0
    %263 = vmatprep.subr.bf16.mxu0 0
    %264 = vmatpush2.bf16.msra.mxu0 0
    %265 = vmatprep.subr.bf16.mxu0 0
    %266 = vmatpush2.bf16.msra.mxu0 0
    %267 = vmatprep.subr.bf16.mxu0 0
    %268 = vmatpush2.bf16.msra.mxu0 0
    %269 = vmatprep.subr.bf16.mxu0 0
    %270 = vmatpush2.bf16.msra.mxu0 0
    %271 = vmatprep.subr.bf16.mxu0 0
    %272 = vmatpush2.bf16.msra.mxu0 0
    %273 = vmatprep.subr.bf16.mxu0 0
    %274 = vmatpush2.bf16.msra.mxu0 0
    %275 = vmatprep.mubr.bf16.mxu0 0
    %276 = vmatmul.mubr.bf16.gmra.mxu0 %v94
    %v277 = vpop.f32.mrf.mxu0
    %v278 = vadd.f32 0.0, %v277
    %v279 = vpop.f32.mrf.mxu0
    %v280 = vadd.f32 0.0, %v279
    %v281 = vpop.f32.mrf.mxu0
    %v282 = vadd.f32 0.0, %v281
    %v283 = vpop.f32.mrf.mxu0
    %v284 = vadd.f32 0.0, %v283
    %285 = vmatprep.mubr.bf16.mxu0 0
    %286 = vmatmul.mubr.bf16.gmra.mxu0 %v97
    %v287 = vpop.f32.mrf.mxu0
    %v288 = vadd.f32 0.0, %v287
    %v289 = vpop.f32.mrf.mxu0
    %v290 = vadd.f32 0.0, %v289
    %v291 = vpop.f32.mrf.mxu0
    %v292 = vadd.f32 0.0, %v291
    %v293 = vpop.f32.mrf.mxu0
    %v294 = vadd.f32 0.0, %v293
    %295 = vmatprep.mubr.bf16.mxu0 0
    %296 = vmatmul.mubr.bf16.gmra.mxu0 %v100
    %v297 = vpop.f32.mrf.mxu0
    %v298 = vadd.f32 0.0, %v297
    %v299 = vpop.f32.mrf.mxu0
    %v300 = vadd.f32 0.0, %v299
    %v301 = vpop.f32.mrf.mxu0
    %v302 = vadd.f32 0.0, %v301
    %v303 = vpop.f32.mrf.mxu0
    %v304 = vadd.f32 0.0, %v303
    %305 = vmatprep.mubr.bf16.mxu0 0
    %306 = vmatmul.mubr.bf16.gmra.mxu0 %v103
    %v307 = vpop.f32.mrf.mxu0
    %v308 = vadd.f32 0.0, %v307
    %v309 = vpop.f32.mrf.mxu0
    %v310 = vadd.f32 0.0, %v309
    %v311 = vpop.f32.mrf.mxu0
    %v312 = vadd.f32 0.0, %v311
    %v313 = vpop.f32.mrf.mxu0
    %v314 = vadd.f32 0.0, %v313
    %315 = vmatprep.mubr.bf16.mxu0 0
    %316 = vmatmul.mubr.bf16.gmra.mxu0 %v106
    %v317 = vpop.f32.mrf.mxu0
    %v318 = vadd.f32 0.0, %v317
    %v319 = vpop.f32.mrf.mxu0
    %v320 = vadd.f32 0.0, %v319
    %v321 = vpop.f32.mrf.mxu0
    %v322 = vadd.f32 0.0, %v321
    %v323 = vpop.f32.mrf.mxu0
    %v324 = vadd.f32 0.0, %v323
    %325 = vmatprep.mubr.bf16.mxu0 0
    %326 = vmatmul.mubr.bf16.gmra.mxu0 %v109
    %v327 = vpop.f32.mrf.mxu0
    %v328 = vadd.f32 0.0, %v327
    %v329 = vpop.f32.mrf.mxu0
    %v330 = vadd.f32 0.0, %v329
    %v331 = vpop.f32.mrf.mxu0
    %v332 = vadd.f32 0.0, %v331
    %v333 = vpop.f32.mrf.mxu0
    %v334 = vadd.f32 0.0, %v333
    %335 = vmatprep.mubr.bf16.mxu0 0
    %336 = vmatmul.mubr.bf16.gmra.mxu0 %v112
    %v337 = vpop.f32.mrf.mxu0
    %v338 = vadd.f32 0.0, %v337
    %v339 = vpop.f32.mrf.mxu0
    %v340 = vadd.f32 0.0, %v339
    %v341 = vpop.f32.mrf.mxu0
    %v342 = vadd.f32 0.0, %v341
    %v343 = vpop.f32.mrf.mxu0
    %v344 = vadd.f32 0.0, %v343
    %345 = vmatprep.mubr.bf16.mxu0 0
    %346 = vmatmul.mubr.bf16.gmra.mxu0 %v115
    %v347 = vpop.f32.mrf.mxu0
    %v348 = vadd.f32 0.0, %v347
    %v349 = vpop.f32.mrf.mxu0
    %v350 = vadd.f32 0.0, %v349
    %v351 = vpop.f32.mrf.mxu0
    %v352 = vadd.f32 0.0, %v351
    %v353 = vpop.f32.mrf.mxu0
    %v354 = vadd.f32 0.0, %v353
    %355 = vdwg.mxu0
    %v356 = vpack.c.bf16 %v169, %v165
    %v357 = vpack.c.bf16 %v171, %v167
    %v358 = vpack.c.bf16 %v282, %v278
    %v359 = vpack.c.bf16 %v284, %v280
    %v360 = vpack.c.bf16 %v179, %v175
    %v361 = vpack.c.bf16 %v181, %v177
    %v362 = vpack.c.bf16 %v292, %v288
    %v363 = vpack.c.bf16 %v294, %v290
    %v364 = vpack.c.bf16 %v189, %v185
    %v365 = vpack.c.bf16 %v191, %v187
    %v366 = vpack.c.bf16 %v302, %v298
    %v367 = vpack.c.bf16 %v304, %v300
    %v368 = vpack.c.bf16 %v199, %v195
    %v369 = vpack.c.bf16 %v201, %v197
    %v370 = vpack.c.bf16 %v312, %v308
    %v371 = vpack.c.bf16 %v314, %v310
    %v372 = vpack.c.bf16 %v209, %v205
    %v373 = vpack.c.bf16 %v211, %v207
    %v374 = vpack.c.bf16 %v322, %v318
    %v375 = vpack.c.bf16 %v324, %v320
    %v376 = vpack.c.bf16 %v219, %v215
    %v377 = vpack.c.bf16 %v221, %v217
    %v378 = vpack.c.bf16 %v332, %v328
    %v379 = vpack.c.bf16 %v334, %v330
    %v380 = vpack.c.bf16 %v229, %v225
    %v381 = vpack.c.bf16 %v231, %v227
    %v382 = vpack.c.bf16 %v342, %v338
    %v383 = vpack.c.bf16 %v344, %v340
    %v384 = vpack.c.bf16 %v239, %v235
    %v385 = vpack.c.bf16 %v241, %v237
    %v386 = vpack.c.bf16 %v352, %v348
    %v387 = vpack.c.bf16 %v354, %v350
    %v388 = vld [vmem:[%s2] sm:$0xf]
    %v389 = vld [vmem:[%s2 + $0x4] sm:$0xf]
    %v390 = vld [vmem:[%s2 + $0x8] sm:$0xf]
    %v391 = vld [vmem:[%s2 + $0xc] sm:$0xf]
    %v392 = vld [vmem:[%s2 + $0x10] sm:$0xf]
    %v393 = vld [vmem:[%s2 + $0x14] sm:$0xf]
    %v394 = vld [vmem:[%s2 + $0x18] sm:$0xf]
    %v395 = vld [vmem:[%s2 + $0x1c] sm:$0xf]
    %v396 = vld [vmem:[%s2 + $0x20] sm:$0xf]
    %v397 = vld [vmem:[%s2 + $0x24] sm:$0xf]
    %v398 = vld [vmem:[%s2 + $0x28] sm:$0xf]
    %v399 = vld [vmem:[%s2 + $0x2c] sm:$0xf]
    %v400 = vld [vmem:[%s2 + $0x30] sm:$0xf]
    %v401 = vld [vmem:[%s2 + $0x34] sm:$0xf]
    %v402 = vld [vmem:[%s2 + $0x38] sm:$0xf]
    %v403 = vld [vmem:[%s2 + $0x3c] sm:$0xf]
    %405 = vset.pattern.permute.xlu0 0
    %406 = vperm.xlu0 %405, %v388
    %v407 = vpop.permute.xlu0 %406
    %v410 = vunpack.c.l.s4 839922192
    %v411 = vunpack.c.0.s8 %v410
    %v412 = vlaneseq
    %v413 = vshrl.u32 %v412, 7
    %v414 = vsub.s32 %v411, %v413
    %v415 = vrot.slane %v407, %v414
    %417 = vset.pattern.permute.xlu0 0
    %418 = vperm.xlu0 %417, %v389
    %v419 = vpop.permute.xlu0 %418
    %v422 = vunpack.c.l.s4 839922192
    %v423 = vunpack.c.0.s8 %v422
    %v424 = vlaneseq
    %v425 = vshrl.u32 %v424, 7
    %v426 = vsub.s32 %v423, %v425
    %v427 = vrot.slane %v419, %v426
    %429 = vset.pattern.permute.xlu0 0
    %430 = vperm.xlu0 %429, %v390
    %v431 = vpop.permute.xlu0 %430
    %v434 = vunpack.c.l.s4 839922192
    %v435 = vunpack.c.0.s8 %v434
    %v436 = vlaneseq
    %v437 = vshrl.u32 %v436, 7
    %v438 = vsub.s32 %v435, %v437
    %v439 = vrot.slane %v431, %v438
    %441 = vset.pattern.permute.xlu0 0
    %442 = vperm.xlu0 %441, %v391
    %v443 = vpop.permute.xlu0 %442
    %v446 = vunpack.c.l.s4 839922192
    %v447 = vunpack.c.0.s8 %v446
    %v448 = vlaneseq
    %v449 = vshrl.u32 %v448, 7
    %v450 = vsub.s32 %v447, %v449
    %v451 = vrot.slane %v443, %v450
    %453 = vset.pattern.permute.xlu0 0
    %454 = vperm.xlu0 %453, %v392
    %v455 = vpop.permute.xlu0 %454
    %v458 = vunpack.c.l.s4 839922192
    %v459 = vunpack.c.0.s8 %v458
    %v460 = vlaneseq
    %v461 = vshrl.u32 %v460, 7
    %v462 = vsub.s32 %v459, %v461
    %v463 = vrot.slane %v455, %v462
    %465 = vset.pattern.permute.xlu0 0
    %466 = vperm.xlu0 %465, %v393
    %v467 = vpop.permute.xlu0 %466
    %v470 = vunpack.c.l.s4 839922192
    %v471 = vunpack.c.0.s8 %v470
    %v472 = vlaneseq
    %v473 = vshrl.u32 %v472, 7
    %v474 = vsub.s32 %v471, %v473
    %v475 = vrot.slane %v467, %v474
    %477 = vset.pattern.permute.xlu0 0
    %478 = vperm.xlu0 %477, %v394
    %v479 = vpop.permute.xlu0 %478
    %v482 = vunpack.c.l.s4 839922192
    %v483 = vunpack.c.0.s8 %v482
    %v484 = vlaneseq
    %v485 = vshrl.u32 %v484, 7
    %v486 = vsub.s32 %v483, %v485
    %v487 = vrot.slane %v479, %v486
    %489 = vset.pattern.permute.xlu0 0
    %490 = vperm.xlu0 %489, %v395
    %v491 = vpop.permute.xlu0 %490
    %v494 = vunpack.c.l.s4 839922192
    %v495 = vunpack.c.0.s8 %v494
    %v496 = vlaneseq
    %v497 = vshrl.u32 %v496, 7
    %v498 = vsub.s32 %v495, %v497
    %v499 = vrot.slane %v491, %v498
    %501 = vset.pattern.permute.xlu0 0
    %502 = vperm.xlu0 %501, %v396
    %v503 = vpop.permute.xlu0 %502
    %v506 = vunpack.c.l.s4 839922192
    %v507 = vunpack.c.0.s8 %v506
    %v508 = vlaneseq
    %v509 = vshrl.u32 %v508, 7
    %v510 = vsub.s32 %v507, %v509
    %v511 = vrot.slane %v503, %v510
    %513 = vset.pattern.permute.xlu0 0
    %514 = vperm.xlu0 %513, %v397
    %v515 = vpop.permute.xlu0 %514
    %v518 = vunpack.c.l.s4 839922192
    %v519 = vunpack.c.0.s8 %v518
    %v520 = vlaneseq
    %v521 = vshrl.u32 %v520, 7
    %v522 = vsub.s32 %v519, %v521
    %v523 = vrot.slane %v515, %v522
    %525 = vset.pattern.permute.xlu0 0
    %526 = vperm.xlu0 %525, %v398
    %v527 = vpop.permute.xlu0 %526
    %v530 = vunpack.c.l.s4 839922192
    %v531 = vunpack.c.0.s8 %v530
    %v532 = vlaneseq
    %v533 = vshrl.u32 %v532, 7
    %v534 = vsub.s32 %v531, %v533
    %v535 = vrot.slane %v527, %v534
    %537 = vset.pattern.permute.xlu0 0
    %538 = vperm.xlu0 %537, %v399
    %v539 = vpop.permute.xlu0 %538
    %v542 = vunpack.c.l.s4 839922192
    %v543 = vunpack.c.0.s8 %v542
    %v544 = vlaneseq
    %v545 = vshrl.u32 %v544, 7
    %v546 = vsub.s32 %v543, %v545
    %v547 = vrot.slane %v539, %v546
    %549 = vset.pattern.permute.xlu0 0
    %550 = vperm.xlu0 %549, %v400
    %v551 = vpop.permute.xlu0 %550
    %v554 = vunpack.c.l.s4 839922192
    %v555 = vunpack.c.0.s8 %v554
    %v556 = vlaneseq
    %v557 = vshrl.u32 %v556, 7
    %v558 = vsub.s32 %v555, %v557
    %v559 = vrot.slane %v551, %v558
    %561 = vset.pattern.permute.xlu0 0
    %562 = vperm.xlu0 %561, %v401
    %v563 = vpop.permute.xlu0 %562
    %v566 = vunpack.c.l.s4 839922192
    %v567 = vunpack.c.0.s8 %v566
    %v568 = vlaneseq
    %v569 = vshrl.u32 %v568, 7
    %v570 = vsub.s32 %v567, %v569
    %v571 = vrot.slane %v563, %v570
    %573 = vset.pattern.permute.xlu0 0
    %574 = vperm.xlu0 %573, %v402
    %v575 = vpop.permute.xlu0 %574
    %v578 = vunpack.c.l.s4 839922192
    %v579 = vunpack.c.0.s8 %v578
    %v580 = vlaneseq
    %v581 = vshrl.u32 %v580, 7
    %v582 = vsub.s32 %v579, %v581
    %v583 = vrot.slane %v575, %v582
    %585 = vset.pattern.permute.xlu0 0
    %586 = vperm.xlu0 %585, %v403
    %v587 = vpop.permute.xlu0 %586
    %v590 = vunpack.c.l.s4 839922192
    %v591 = vunpack.c.0.s8 %v590
    %v592 = vlaneseq
    %v593 = vshrl.u32 %v592, 7
    %v594 = vsub.s32 %v591, %v593
    %v595 = vrot.slane %v587, %v594
    %v612 = vunpack.c.l.b16 %v415
    %v613 = vunpack.c.l.b16 %v427
    %v614 = vunpack.c.l.b16 %v439
    %v615 = vunpack.c.l.b16 %v451
    %v616 = vunpack.c.l.b16 %v463
    %v617 = vunpack.c.l.b16 %v475
    %v618 = vunpack.c.l.b16 %v487
    %v619 = vunpack.c.l.b16 %v499
    %v620 = vunpack.c.l.b16 %v511
    %v621 = vunpack.c.l.b16 %v523
    %v622 = vunpack.c.l.b16 %v535
    %v623 = vunpack.c.l.b16 %v547
    %v624 = vunpack.c.l.b16 %v559
    %v625 = vunpack.c.l.b16 %v571
    %v626 = vunpack.c.l.b16 %v583
    %v627 = vunpack.c.l.b16 %v595
    %v628 = vpack.c.b16 %v613, %v612
    %v629 = vpack.c.b16 %v615, %v614
    %v630 = vpack.c.b16 %v617, %v616
    %v631 = vpack.c.b16 %v619, %v618
    %v632 = vpack.c.b16 %v621, %v620
    %v633 = vpack.c.b16 %v623, %v622
    %v634 = vpack.c.b16 %v625, %v624
    %v635 = vpack.c.b16 %v627, %v626
    %v644 = vadd.bf16 %v356, %v628
    %v645 = vadd.bf16 %v357, %v628
    %v646 = vadd.bf16 %v358, %v628
    %v647 = vadd.bf16 %v359, %v628
    %v648 = vadd.bf16 %v360, %v629
    %v649 = vadd.bf16 %v361, %v629
    %v650 = vadd.bf16 %v362, %v629
    %v651 = vadd.bf16 %v363, %v629
    %v652 = vadd.bf16 %v364, %v630
    %v653 = vadd.bf16 %v365, %v630
    %v654 = vadd.bf16 %v366, %v630
    %v655 = vadd.bf16 %v367, %v630
    %v656 = vadd.bf16 %v368, %v631
    %v657 = vadd.bf16 %v369, %v631
    %v658 = vadd.bf16 %v370, %v631
    %v659 = vadd.bf16 %v371, %v631
    %v660 = vadd.bf16 %v372, %v632
    %v661 = vadd.bf16 %v373, %v632
    %v662 = vadd.bf16 %v374, %v632
    %v663 = vadd.bf16 %v375, %v632
    %v664 = vadd.bf16 %v376, %v633
    %v665 = vadd.bf16 %v377, %v633
    %v666 = vadd.bf16 %v378, %v633
    %v667 = vadd.bf16 %v379, %v633
    %v668 = vadd.bf16 %v380, %v634
    %v669 = vadd.bf16 %v381, %v634
    %v670 = vadd.bf16 %v382, %v634
    %v671 = vadd.bf16 %v383, %v634
    %v672 = vadd.bf16 %v384, %v635
    %v673 = vadd.bf16 %v385, %v635
    %v674 = vadd.bf16 %v386, %v635
    %v675 = vadd.bf16 %v387, %v635
    %v676 = vmax.bf16 %v644, 0
    %v677 = vmax.bf16 %v645, 0
    %v678 = vmax.bf16 %v646, 0
    %v679 = vmax.bf16 %v647, 0
    %v680 = vmax.bf16 %v648, 0
    %v681 = vmax.bf16 %v649, 0
    %v682 = vmax.bf16 %v650, 0
    %v683 = vmax.bf16 %v651, 0
    %v684 = vmax.bf16 %v652, 0
    %v685 = vmax.bf16 %v653, 0
    %v686 = vmax.bf16 %v654, 0
    %v687 = vmax.bf16 %v655, 0
    %v688 = vmax.bf16 %v656, 0
    %v689 = vmax.bf16 %v657, 0
    %v690 = vmax.bf16 %v658, 0
    %v691 = vmax.bf16 %v659, 0
    %v692 = vmax.bf16 %v660, 0
    %v693 = vmax.bf16 %v661, 0
    %v694 = vmax.bf16 %v662, 0
    %v695 = vmax.bf16 %v663, 0
    %v696 = vmax.bf16 %v664, 0
    %v697 = vmax.bf16 %v665, 0
    %v698 = vmax.bf16 %v666, 0
    %v699 = vmax.bf16 %v667, 0
    %v700 = vmax.bf16 %v668, 0
    %v701 = vmax.bf16 %v669, 0
    %v702 = vmax.bf16 %v670, 0
    %v703 = vmax.bf16 %v671, 0
    %v704 = vmax.bf16 %v672, 0
    %v705 = vmax.bf16 %v673, 0
    %v706 = vmax.bf16 %v674, 0
    %v707 = vmax.bf16 %v675, 0
    %v708 = vld [vmem:[%s3] sm:$0xf]
    %v709 = vld [vmem:[%s3 + $0x4] sm:$0xf]
    %v710 = vld [vmem:[%s3 + $0x8] sm:$0xf]
    %v711 = vld [vmem:[%s3 + $0xc] sm:$0xf]
    %v712 = vld [vmem:[%s3 + $0x10] sm:$0xf]
    %v713 = vld [vmem:[%s3 + $0x14] sm:$0xf]
    %v714 = vld [vmem:[%s3 + $0x18] sm:$0xf]
    %v715 = vld [vmem:[%s3 + $0x1c] sm:$0xf]
    %v716 = vld [vmem:[%s3 + $0x20] sm:$0xf]
    %v717 = vld [vmem:[%s3 + $0x24] sm:$0xf]
    %v718 = vld [vmem:[%s3 + $0x28] sm:$0xf]
    %v719 = vld [vmem:[%s3 + $0x2c] sm:$0xf]
    %v720 = vld [vmem:[%s3 + $0x30] sm:$0xf]
    %v721 = vld [vmem:[%s3 + $0x34] sm:$0xf]
    %v722 = vld [vmem:[%s3 + $0x38] sm:$0xf]
    %v723 = vld [vmem:[%s3 + $0x3c] sm:$0xf]
    %v740 = vunpack.c.l.b16 %v708
    %v741 = vunpack.c.l.b16 %v709
    %v742 = vunpack.c.l.b16 %v710
    %v743 = vunpack.c.l.b16 %v711
    %v744 = vunpack.c.l.b16 %v712
    %v745 = vunpack.c.l.b16 %v713
    %v746 = vunpack.c.l.b16 %v714
    %v747 = vunpack.c.l.b16 %v715
    %v748 = vunpack.c.l.b16 %v716
    %v749 = vunpack.c.l.b16 %v717
    %v750 = vunpack.c.l.b16 %v718
    %v751 = vunpack.c.l.b16 %v719
    %v752 = vunpack.c.l.b16 %v720
    %v753 = vunpack.c.l.b16 %v721
    %v754 = vunpack.c.l.b16 %v722
    %v755 = vunpack.c.l.b16 %v723
    %v756 = vpack.c.b16 %v741, %v740
    %v757 = vpack.c.b16 %v743, %v742
    %v758 = vpack.c.b16 %v745, %v744
    %v759 = vpack.c.b16 %v747, %v746
    %v760 = vpack.c.b16 %v749, %v748
    %v761 = vpack.c.b16 %v751, %v750
    %v762 = vpack.c.b16 %v753, %v752
    %v763 = vpack.c.b16 %v755, %v754
    %772 = vmatprep.subr.bf16.mxu0 %v705
    %773 = vmatpush1.bf16.msra.mxu0 %v704
    %774 = vmatprep.subr.bf16.mxu0 %v701
    %775 = vmatpush1.bf16.msra.mxu0 %v700
    %776 = vmatprep.subr.bf16.mxu0 %v697
    %777 = vmatpush1.bf16.msra.mxu0 %v696
    %778 = vmatprep.subr.bf16.mxu0 %v693
    %779 = vmatpush1.bf16.msra.mxu0 %v692
    %780 = vmatprep.subr.bf16.mxu0 %v689
    %781 = vmatpush1.bf16.msra.mxu0 %v688
    %782 = vmatprep.subr.bf16.mxu0 %v685
    %783 = vmatpush1.bf16.msra.mxu0 %v684
    %784 = vmatprep.subr.bf16.mxu0 %v681
    %785 = vmatpush1.bf16.msra.mxu0 %v680
    %786 = vmatprep.subr.bf16.mxu0 %v677
    %787 = vmatpush1.bf16.msra.mxu0 %v676
    %788 = vmatprep.subr.bf16.mxu0 0
    %789 = vmatpush2.bf16.msra.mxu0 0
    %790 = vmatprep.subr.bf16.mxu0 0
    %791 = vmatpush2.bf16.msra.mxu0 0
    %792 = vmatprep.subr.bf16.mxu0 0
    %793 = vmatpush2.bf16.msra.mxu0 0
    %794 = vmatprep.subr.bf16.mxu0 0
    %795 = vmatpush2.bf16.msra.mxu0 0
    %796 = vmatprep.subr.bf16.mxu0 0
    %797 = vmatpush2.bf16.msra.mxu0 0
    %798 = vmatprep.subr.bf16.mxu0 0
    %799 = vmatpush2.bf16.msra.mxu0 0
    %800 = vmatprep.subr.bf16.mxu0 0
    %801 = vmatpush2.bf16.msra.mxu0 0
    %802 = vmatprep.subr.bf16.mxu0 0
    %803 = vmatpush2.bf16.msra.mxu0 0
    %804 = vmatprep.mubr.bf16.mxu0 0
    %805 = vmatmul.mubr.bf16.gmra.mxu0 %v756
    %v806 = vpop.f32.mrf.mxu0
    %v807 = vadd.f32 0.0, %v806
    %v808 = vpop.f32.mrf.mxu0
    %v809 = vadd.f32 0.0, %v808
    %v810 = vpop.f32.mrf.mxu0
    %v811 = vadd.f32 0.0, %v810
    %v812 = vpop.f32.mrf.mxu0
    %v813 = vadd.f32 0.0, %v812
    %814 = vmatprep.mubr.bf16.mxu0 0
    %815 = vmatmul.mubr.bf16.gmra.mxu0 %v757
    %v816 = vpop.f32.mrf.mxu0
    %v817 = vadd.f32 0.0, %v816
    %v818 = vpop.f32.mrf.mxu0
    %v819 = vadd.f32 0.0, %v818
    %v820 = vpop.f32.mrf.mxu0
    %v821 = vadd.f32 0.0, %v820
    %v822 = vpop.f32.mrf.mxu0
    %v823 = vadd.f32 0.0, %v822
    %824 = vmatprep.mubr.bf16.mxu0 0
    %825 = vmatmul.mubr.bf16.gmra.mxu0 %v758
    %v826 = vpop.f32.mrf.mxu0
    %v827 = vadd.f32 0.0, %v826
    %v828 = vpop.f32.mrf.mxu0
    %v829 = vadd.f32 0.0, %v828
    %v830 = vpop.f32.mrf.mxu0
    %v831 = vadd.f32 0.0, %v830
    %v832 = vpop.f32.mrf.mxu0
    %v833 = vadd.f32 0.0, %v832
    %834 = vmatprep.mubr.bf16.mxu0 0
    %835 = vmatmul.mubr.bf16.gmra.mxu0 %v759
    %v836 = vpop.f32.mrf.mxu0
    %v837 = vadd.f32 0.0, %v836
    %v838 = vpop.f32.mrf.mxu0
    %v839 = vadd.f32 0.0, %v838
    %v840 = vpop.f32.mrf.mxu0
    %v841 = vadd.f32 0.0, %v840
    %v842 = vpop.f32.mrf.mxu0
    %v843 = vadd.f32 0.0, %v842
    %844 = vmatprep.mubr.bf16.mxu0 0
    %845 = vmatmul.mubr.bf16.gmra.mxu0 %v760
    %v846 = vpop.f32.mrf.mxu0
    %v847 = vadd.f32 0.0, %v846
    %v848 = vpop.f32.mrf.mxu0
    %v849 = vadd.f32 0.0, %v848
    %v850 = vpop.f32.mrf.mxu0
    %v851 = vadd.f32 0.0, %v850
    %v852 = vpop.f32.mrf.mxu0
    %v853 = vadd.f32 0.0, %v852
    %854 = vmatprep.mubr.bf16.mxu0 0
    %855 = vmatmul.mubr.bf16.gmra.mxu0 %v761
    %v856 = vpop.f32.mrf.mxu0
    %v857 = vadd.f32 0.0, %v856
    %v858 = vpop.f32.mrf.mxu0
    %v859 = vadd.f32 0.0, %v858
    %v860 = vpop.f32.mrf.mxu0
    %v861 = vadd.f32 0.0, %v860
    %v862 = vpop.f32.mrf.mxu0
    %v863 = vadd.f32 0.0, %v862
    %864 = vmatprep.mubr.bf16.mxu0 0
    %865 = vmatmul.mubr.bf16.gmra.mxu0 %v762
    %v866 = vpop.f32.mrf.mxu0
    %v867 = vadd.f32 0.0, %v866
    %v868 = vpop.f32.mrf.mxu0
    %v869 = vadd.f32 0.0, %v868
    %v870 = vpop.f32.mrf.mxu0
    %v871 = vadd.f32 0.0, %v870
    %v872 = vpop.f32.mrf.mxu0
    %v873 = vadd.f32 0.0, %v872
    %874 = vmatprep.mubr.bf16.mxu0 0
    %875 = vmatmul.mubr.bf16.gmra.mxu0 %v763
    %v876 = vpop.f32.mrf.mxu0
    %v877 = vadd.f32 0.0, %v876
    %v878 = vpop.f32.mrf.mxu0
    %v879 = vadd.f32 0.0, %v878
    %v880 = vpop.f32.mrf.mxu0
    %v881 = vadd.f32 0.0, %v880
    %v882 = vpop.f32.mrf.mxu0
    %v883 = vadd.f32 0.0, %v882
    %884 = vdwg.mxu0
    %885 = vmatprep.subr.bf16.mxu0 %v707
    %886 = vmatpush1.bf16.msra.mxu0 %v706
    %887 = vmatprep.subr.bf16.mxu0 %v703
    %888 = vmatpush1.bf16.msra.mxu0 %v702
    %889 = vmatprep.subr.bf16.mxu0 %v699
    %890 = vmatpush1.bf16.msra.mxu0 %v698
    %891 = vmatprep.subr.bf16.mxu0 %v695
    %892 = vmatpush1.bf16.msra.mxu0 %v694
    %893 = vmatprep.subr.bf16.mxu0 %v691
    %894 = vmatpush1.bf16.msra.mxu0 %v690
    %895 = vmatprep.subr.bf16.mxu0 %v687
    %896 = vmatpush1.bf16.msra.mxu0 %v686
    %897 = vmatprep.subr.bf16.mxu0 %v683
    %898 = vmatpush1.bf16.msra.mxu0 %v682
    %899 = vmatprep.subr.bf16.mxu0 %v679
    %900 = vmatpush1.bf16.msra.mxu0 %v678
    %901 = vmatprep.subr.bf16.mxu0 0
    %902 = vmatpush2.bf16.msra.mxu0 0
    %903 = vmatprep.subr.bf16.mxu0 0
    %904 = vmatpush2.bf16.msra.mxu0 0
    %905 = vmatprep.subr.bf16.mxu0 0
    %906 = vmatpush2.bf16.msra.mxu0 0
    %907 = vmatprep.subr.bf16.mxu0 0
    %908 = vmatpush2.bf16.msra.mxu0 0
    %909 = vmatprep.subr.bf16.mxu0 0
    %910 = vmatpush2.bf16.msra.mxu0 0
    %911 = vmatprep.subr.bf16.mxu0 0
    %912 = vmatpush2.bf16.msra.mxu0 0
    %913 = vmatprep.subr.bf16.mxu0 0
    %914 = vmatpush2.bf16.msra.mxu0 0
    %915 = vmatprep.subr.bf16.mxu0 0
    %916 = vmatpush2.bf16.msra.mxu0 0
    %917 = vmatprep.mubr.bf16.mxu0 0
    %918 = vmatmul.mubr.bf16.gmra.mxu0 %v756
    %v919 = vpop.f32.mrf.mxu0
    %v920 = vadd.f32 0.0, %v919
    %v921 = vpop.f32.mrf.mxu0
    %v922 = vadd.f32 0.0, %v921
    %v923 = vpop.f32.mrf.mxu0
    %v924 = vadd.f32 0.0, %v923
    %v925 = vpop.f32.mrf.mxu0
    %v926 = vadd.f32 0.0, %v925
    %927 = vmatprep.mubr.bf16.mxu0 0
    %928 = vmatmul.mubr.bf16.gmra.mxu0 %v757
    %v929 = vpop.f32.mrf.mxu0
    %v930 = vadd.f32 0.0, %v929
    %v931 = vpop.f32.mrf.mxu0
    %v932 = vadd.f32 0.0, %v931
    %v933 = vpop.f32.mrf.mxu0
    %v934 = vadd.f32 0.0, %v933
    %v935 = vpop.f32.mrf.mxu0
    %v936 = vadd.f32 0.0, %v935
    %937 = vmatprep.mubr.bf16.mxu0 0
    %938 = vmatmul.mubr.bf16.gmra.mxu0 %v758
    %v939 = vpop.f32.mrf.mxu0
    %v940 = vadd.f32 0.0, %v939
    %v941 = vpop.f32.mrf.mxu0
    %v942 = vadd.f32 0.0, %v941
    %v943 = vpop.f32.mrf.mxu0
    %v944 = vadd.f32 0.0, %v943
    %v945 = vpop.f32.mrf.mxu0
    %v946 = vadd.f32 0.0, %v945
    %947 = vmatprep.mubr.bf16.mxu0 0
    %948 = vmatmul.mubr.bf16.gmra.mxu0 %v759
    %v949 = vpop.f32.mrf.mxu0
    %v950 = vadd.f32 0.0, %v949
    %v951 = vpop.f32.mrf.mxu0
    %v952 = vadd.f32 0.0, %v951
    %v953 = vpop.f32.mrf.mxu0
    %v954 = vadd.f32 0.0, %v953
    %v955 = vpop.f32.mrf.mxu0
    %v956 = vadd.f32 0.0, %v955
    %957 = vmatprep.mubr.bf16.mxu0 0
    %958 = vmatmul.mubr.bf16.gmra.mxu0 %v760
    %v959 = vpop.f32.mrf.mxu0
    %v960 = vadd.f32 0.0, %v959
    %v961 = vpop.f32.mrf.mxu0
    %v962 = vadd.f32 0.0, %v961
    %v963 = vpop.f32.mrf.mxu0
    %v964 = vadd.f32 0.0, %v963
    %v965 = vpop.f32.mrf.mxu0
    %v966 = vadd.f32 0.0, %v965
    %967 = vmatprep.mubr.bf16.mxu0 0
    %968 = vmatmul.mubr.bf16.gmra.mxu0 %v761
    %v969 = vpop.f32.mrf.mxu0
    %v970 = vadd.f32 0.0, %v969
    %v971 = vpop.f32.mrf.mxu0
    %v972 = vadd.f32 0.0, %v971
    %v973 = vpop.f32.mrf.mxu0
    %v974 = vadd.f32 0.0, %v973
    %v975 = vpop.f32.mrf.mxu0
    %v976 = vadd.f32 0.0, %v975
    %977 = vmatprep.mubr.bf16.mxu0 0
    %978 = vmatmul.mubr.bf16.gmra.mxu0 %v762
    %v979 = vpop.f32.mrf.mxu0
    %v980 = vadd.f32 0.0, %v979
    %v981 = vpop.f32.mrf.mxu0
    %v982 = vadd.f32 0.0, %v981
    %v983 = vpop.f32.mrf.mxu0
    %v984 = vadd.f32 0.0, %v983
    %v985 = vpop.f32.mrf.mxu0
    %v986 = vadd.f32 0.0, %v985
    %987 = vmatprep.mubr.bf16.mxu0 0
    %988 = vmatmul.mubr.bf16.gmra.mxu0 %v763
    %v989 = vpop.f32.mrf.mxu0
    %v990 = vadd.f32 0.0, %v989
    %v991 = vpop.f32.mrf.mxu0
    %v992 = vadd.f32 0.0, %v991
    %v993 = vpop.f32.mrf.mxu0
    %v994 = vadd.f32 0.0, %v993
    %v995 = vpop.f32.mrf.mxu0
    %v996 = vadd.f32 0.0, %v995
    %997 = vdwg.mxu0
    %v998 = vpack.c.bf16 %v811, %v807
    %v999 = vpack.c.bf16 %v813, %v809
    %v1000 = vpack.c.bf16 %v924, %v920
    %v1001 = vpack.c.bf16 %v926, %v922
    %v1002 = vpack.c.bf16 %v821, %v817
    %v1003 = vpack.c.bf16 %v823, %v819
    %v1004 = vpack.c.bf16 %v934, %v930
    %v1005 = vpack.c.bf16 %v936, %v932
    %v1006 = vpack.c.bf16 %v831, %v827
    %v1007 = vpack.c.bf16 %v833, %v829
    %v1008 = vpack.c.bf16 %v944, %v940
    %v1009 = vpack.c.bf16 %v946, %v942
    %v1010 = vpack.c.bf16 %v841, %v837
    %v1011 = vpack.c.bf16 %v843, %v839
    %v1012 = vpack.c.bf16 %v954, %v950
    %v1013 = vpack.c.bf16 %v956, %v952
    %v1014 = vpack.c.bf16 %v851, %v847
    %v1015 = vpack.c.bf16 %v853, %v849
    %v1016 = vpack.c.bf16 %v964, %v960
    %v1017 = vpack.c.bf16 %v966, %v962
    %v1018 = vpack.c.bf16 %v861, %v857
    %v1019 = vpack.c.bf16 %v863, %v859
    %v1020 = vpack.c.bf16 %v974, %v970
    %v1021 = vpack.c.bf16 %v976, %v972
    %v1022 = vpack.c.bf16 %v871, %v867
    %v1023 = vpack.c.bf16 %v873, %v869
    %v1024 = vpack.c.bf16 %v984, %v980
    %v1025 = vpack.c.bf16 %v986, %v982
    %v1026 = vpack.c.bf16 %v881, %v877
    %v1027 = vpack.c.bf16 %v883, %v879
    %v1028 = vpack.c.bf16 %v994, %v990
    %v1029 = vpack.c.bf16 %v996, %v992
    %v1030 = vld [vmem:[%s4] sm:$0xf]
    %v1031 = vld [vmem:[%s4 + $0x4] sm:$0xf]
    %v1032 = vld [vmem:[%s4 + $0x8] sm:$0xf]
    %v1033 = vld [vmem:[%s4 + $0xc] sm:$0xf]
    %v1034 = vld [vmem:[%s4 + $0x10] sm:$0xf]
    %v1035 = vld [vmem:[%s4 + $0x14] sm:$0xf]
    %v1036 = vld [vmem:[%s4 + $0x18] sm:$0xf]
    %v1037 = vld [vmem:[%s4 + $0x1c] sm:$0xf]
    %v1038 = vld [vmem:[%s4 + $0x20] sm:$0xf]
    %v1039 = vld [vmem:[%s4 + $0x24] sm:$0xf]
    %v1040 = vld [vmem:[%s4 + $0x28] sm:$0xf]
    %v1041 = vld [vmem:[%s4 + $0x2c] sm:$0xf]
    %v1042 = vld [vmem:[%s4 + $0x30] sm:$0xf]
    %v1043 = vld [vmem:[%s4 + $0x34] sm:$0xf]
    %v1044 = vld [vmem:[%s4 + $0x38] sm:$0xf]
    %v1045 = vld [vmem:[%s4 + $0x3c] sm:$0xf]
    %1047 = vset.pattern.permute.xlu0 0
    %1048 = vperm.xlu0 %1047, %v1030
    %v1049 = vpop.permute.xlu0 %1048
    %v1052 = vunpack.c.l.s4 839922192
    %v1053 = vunpack.c.0.s8 %v1052
    %v1054 = vlaneseq
    %v1055 = vshrl.u32 %v1054, 7
    %v1056 = vsub.s32 %v1053, %v1055
    %v1057 = vrot.slane %v1049, %v1056
    %1059 = vset.pattern.permute.xlu0 0
    %1060 = vperm.xlu0 %1059, %v1031
    %v1061 = vpop.permute.xlu0 %1060
    %v1064 = vunpack.c.l.s4 839922192
    %v1065 = vunpack.c.0.s8 %v1064
    %v1066 = vlaneseq
    %v1067 = vshrl.u32 %v1066, 7
    %v1068 = vsub.s32 %v1065, %v1067
    %v1069 = vrot.slane %v1061, %v1068
    %1071 = vset.pattern.permute.xlu0 0
    %1072 = vperm.xlu0 %1071, %v1032
    %v1073 = vpop.permute.xlu0 %1072
    %v1076 = vunpack.c.l.s4 839922192
    %v1077 = vunpack.c.0.s8 %v1076
    %v1078 = vlaneseq
    %v1079 = vshrl.u32 %v1078, 7
    %v1080 = vsub.s32 %v1077, %v1079
    %v1081 = vrot.slane %v1073, %v1080
    %1083 = vset.pattern.permute.xlu0 0
    %1084 = vperm.xlu0 %1083, %v1033
    %v1085 = vpop.permute.xlu0 %1084
    %v1088 = vunpack.c.l.s4 839922192
    %v1089 = vunpack.c.0.s8 %v1088
    %v1090 = vlaneseq
    %v1091 = vshrl.u32 %v1090, 7
    %v1092 = vsub.s32 %v1089, %v1091
    %v1093 = vrot.slane %v1085, %v1092
    %1095 = vset.pattern.permute.xlu0 0
    %1096 = vperm.xlu0 %1095, %v1034
    %v1097 = vpop.permute.xlu0 %1096
    %v1100 = vunpack.c.l.s4 839922192
    %v1101 = vunpack.c.0.s8 %v1100
    %v1102 = vlaneseq
    %v1103 = vshrl.u32 %v1102, 7
    %v1104 = vsub.s32 %v1101, %v1103
    %v1105 = vrot.slane %v1097, %v1104
    %1107 = vset.pattern.permute.xlu0 0
    %1108 = vperm.xlu0 %1107, %v1035
    %v1109 = vpop.permute.xlu0 %1108
    %v1112 = vunpack.c.l.s4 839922192
    %v1113 = vunpack.c.0.s8 %v1112
    %v1114 = vlaneseq
    %v1115 = vshrl.u32 %v1114, 7
    %v1116 = vsub.s32 %v1113, %v1115
    %v1117 = vrot.slane %v1109, %v1116
    %1119 = vset.pattern.permute.xlu0 0
    %1120 = vperm.xlu0 %1119, %v1036
    %v1121 = vpop.permute.xlu0 %1120
    %v1124 = vunpack.c.l.s4 839922192
    %v1125 = vunpack.c.0.s8 %v1124
    %v1126 = vlaneseq
    %v1127 = vshrl.u32 %v1126, 7
    %v1128 = vsub.s32 %v1125, %v1127
    %v1129 = vrot.slane %v1121, %v1128
    %1131 = vset.pattern.permute.xlu0 0
    %1132 = vperm.xlu0 %1131, %v1037
    %v1133 = vpop.permute.xlu0 %1132
    %v1136 = vunpack.c.l.s4 839922192
    %v1137 = vunpack.c.0.s8 %v1136
    %v1138 = vlaneseq
    %v1139 = vshrl.u32 %v1138, 7
    %v1140 = vsub.s32 %v1137, %v1139
    %v1141 = vrot.slane %v1133, %v1140
    %1143 = vset.pattern.permute.xlu0 0
    %1144 = vperm.xlu0 %1143, %v1038
    %v1145 = vpop.permute.xlu0 %1144
    %v1148 = vunpack.c.l.s4 839922192
    %v1149 = vunpack.c.0.s8 %v1148
    %v1150 = vlaneseq
    %v1151 = vshrl.u32 %v1150, 7
    %v1152 = vsub.s32 %v1149, %v1151
    %v1153 = vrot.slane %v1145, %v1152
    %1155 = vset.pattern.permute.xlu0 0
    %1156 = vperm.xlu0 %1155, %v1039
    %v1157 = vpop.permute.xlu0 %1156
    %v1160 = vunpack.c.l.s4 839922192
    %v1161 = vunpack.c.0.s8 %v1160
    %v1162 = vlaneseq
    %v1163 = vshrl.u32 %v1162, 7
    %v1164 = vsub.s32 %v1161, %v1163
    %v1165 = vrot.slane %v1157, %v1164
    %1167 = vset.pattern.permute.xlu0 0
    %1168 = vperm.xlu0 %1167, %v1040
    %v1169 = vpop.permute.xlu0 %1168
    %v1172 = vunpack.c.l.s4 839922192
    %v1173 = vunpack.c.0.s8 %v1172
    %v1174 = vlaneseq
    %v1175 = vshrl.u32 %v1174, 7
    %v1176 = vsub.s32 %v1173, %v1175
    %v1177 = vrot.slane %v1169, %v1176
    %1179 = vset.pattern.permute.xlu0 0
    %1180 = vperm.xlu0 %1179, %v1041
    %v1181 = vpop.permute.xlu0 %1180
    %v1184 = vunpack.c.l.s4 839922192
    %v1185 = vunpack.c.0.s8 %v1184
    %v1186 = vlaneseq
    %v1187 = vshrl.u32 %v1186, 7
    %v1188 = vsub.s32 %v1185, %v1187
    %v1189 = vrot.slane %v1181, %v1188
    %1191 = vset.pattern.permute.xlu0 0
    %1192 = vperm.xlu0 %1191, %v1042
    %v1193 = vpop.permute.xlu0 %1192
    %v1196 = vunpack.c.l.s4 839922192
    %v1197 = vunpack.c.0.s8 %v1196
    %v1198 = vlaneseq
    %v1199 = vshrl.u32 %v1198, 7
    %v1200 = vsub.s32 %v1197, %v1199
    %v1201 = vrot.slane %v1193, %v1200
    %1203 = vset.pattern.permute.xlu0 0
    %1204 = vperm.xlu0 %1203, %v1043
    %v1205 = vpop.permute.xlu0 %1204
    %v1208 = vunpack.c.l.s4 839922192
    %v1209 = vunpack.c.0.s8 %v1208
    %v1210 = vlaneseq
    %v1211 = vshrl.u32 %v1210, 7
    %v1212 = vsub.s32 %v1209, %v1211
    %v1213 = vrot.slane %v1205, %v1212
    %1215 = vset.pattern.permute.xlu0 0
    %1216 = vperm.xlu0 %1215, %v1044
    %v1217 = vpop.permute.xlu0 %1216
    %v1220 = vunpack.c.l.s4 839922192
    %v1221 = vunpack.c.0.s8 %v1220
    %v1222 = vlaneseq
    %v1223 = vshrl.u32 %v1222, 7
    %v1224 = vsub.s32 %v1221, %v1223
    %v1225 = vrot.slane %v1217, %v1224
    %1227 = vset.pattern.permute.xlu0 0
    %1228 = vperm.xlu0 %1227, %v1045
    %v1229 = vpop.permute.xlu0 %1228
    %v1232 = vunpack.c.l.s4 839922192
    %v1233 = vunpack.c.0.s8 %v1232
    %v1234 = vlaneseq
    %v1235 = vshrl.u32 %v1234, 7
    %v1236 = vsub.s32 %v1233, %v1235
    %v1237 = vrot.slane %v1229, %v1236
    %v1254 = vunpack.c.l.b16 %v1057
    %v1255 = vunpack.c.l.b16 %v1069
    %v1256 = vunpack.c.l.b16 %v1081
    %v1257 = vunpack.c.l.b16 %v1093
    %v1258 = vunpack.c.l.b16 %v1105
    %v1259 = vunpack.c.l.b16 %v1117
    %v1260 = vunpack.c.l.b16 %v1129
    %v1261 = vunpack.c.l.b16 %v1141
    %v1262 = vunpack.c.l.b16 %v1153
    %v1263 = vunpack.c.l.b16 %v1165
    %v1264 = vunpack.c.l.b16 %v1177
    %v1265 = vunpack.c.l.b16 %v1189
    %v1266 = vunpack.c.l.b16 %v1201
    %v1267 = vunpack.c.l.b16 %v1213
    %v1268 = vunpack.c.l.b16 %v1225
    %v1269 = vunpack.c.l.b16 %v1237
    %v1270 = vpack.c.b16 %v1255, %v1254
    %v1271 = vpack.c.b16 %v1257, %v1256
    %v1272 = vpack.c.b16 %v1259, %v1258
    %v1273 = vpack.c.b16 %v1261, %v1260
    %v1274 = vpack.c.b16 %v1263, %v1262
    %v1275 = vpack.c.b16 %v1265, %v1264
    %v1276 = vpack.c.b16 %v1267, %v1266
    %v1277 = vpack.c.b16 %v1269, %v1268
    %v1286 = vadd.bf16 %v998, %v1270
    %v1287 = vadd.bf16 %v999, %v1270
    %v1288 = vadd.bf16 %v1000, %v1270
    %v1289 = vadd.bf16 %v1001, %v1270
    %v1290 = vadd.bf16 %v1002, %v1271
    %v1291 = vadd.bf16 %v1003, %v1271
    %v1292 = vadd.bf16 %v1004, %v1271
    %v1293 = vadd.bf16 %v1005, %v1271
    %v1294 = vadd.bf16 %v1006, %v1272
    %v1295 = vadd.bf16 %v1007, %v1272
    %v1296 = vadd.bf16 %v1008, %v1272
    %v1297 = vadd.bf16 %v1009, %v1272
    %v1298 = vadd.bf16 %v1010, %v1273
    %v1299 = vadd.bf16 %v1011, %v1273
    %v1300 = vadd.bf16 %v1012, %v1273
    %v1301 = vadd.bf16 %v1013, %v1273
    %v1302 = vadd.bf16 %v1014, %v1274
    %v1303 = vadd.bf16 %v1015, %v1274
    %v1304 = vadd.bf16 %v1016, %v1274
    %v1305 = vadd.bf16 %v1017, %v1274
    %v1306 = vadd.bf16 %v1018, %v1275
    %v1307 = vadd.bf16 %v1019, %v1275
    %v1308 = vadd.bf16 %v1020, %v1275
    %v1309 = vadd.bf16 %v1021, %v1275
    %v1310 = vadd.bf16 %v1022, %v1276
    %v1311 = vadd.bf16 %v1023, %v1276
    %v1312 = vadd.bf16 %v1024, %v1276
    %v1313 = vadd.bf16 %v1025, %v1276
    %v1314 = vadd.bf16 %v1026, %v1277
    %v1315 = vadd.bf16 %v1027, %v1277
    %v1316 = vadd.bf16 %v1028, %v1277
    %v1317 = vadd.bf16 %v1029, %v1277
    %v1318 = vmax.bf16 %v1286, 0
    %v1319 = vmax.bf16 %v1287, 0
    %v1320 = vmax.bf16 %v1288, 0
    %v1321 = vmax.bf16 %v1289, 0
    %v1322 = vmax.bf16 %v1290, 0
    %v1323 = vmax.bf16 %v1291, 0
    %v1324 = vmax.bf16 %v1292, 0
    %v1325 = vmax.bf16 %v1293, 0
    %v1326 = vmax.bf16 %v1294, 0
    %v1327 = vmax.bf16 %v1295, 0
    %v1328 = vmax.bf16 %v1296, 0
    %v1329 = vmax.bf16 %v1297, 0
    %v1330 = vmax.bf16 %v1298, 0
    %v1331 = vmax.bf16 %v1299, 0
    %v1332 = vmax.bf16 %v1300, 0
    %v1333 = vmax.bf16 %v1301, 0
    %v1334 = vmax.bf16 %v1302, 0
    %v1335 = vmax.bf16 %v1303, 0
    %v1336 = vmax.bf16 %v1304, 0
    %v1337 = vmax.bf16 %v1305, 0
    %v1338 = vmax.bf16 %v1306, 0
    %v1339 = vmax.bf16 %v1307, 0
    %v1340 = vmax.bf16 %v1308, 0
    %v1341 = vmax.bf16 %v1309, 0
    %v1342 = vmax.bf16 %v1310, 0
    %v1343 = vmax.bf16 %v1311, 0
    %v1344 = vmax.bf16 %v1312, 0
    %v1345 = vmax.bf16 %v1313, 0
    %v1346 = vmax.bf16 %v1314, 0
    %v1347 = vmax.bf16 %v1315, 0
    %v1348 = vmax.bf16 %v1316, 0
    %v1349 = vmax.bf16 %v1317, 0
    %v1350 = vld [vmem:[%s5] sm:$0x3]
    %v1351 = vld [vmem:[%s6] sm:$0x7]
    %1353 = vset.pattern.permute.xlu0 0
    %1354 = vperm.xlu0 %1353, %v1351
    %v1355 = vpop.permute.xlu0 %1354
    %1357 = vmatprep.subr.bf16.mxu0 %v1347
    %1358 = vmatpush1.bf16.msra.mxu0 %v1346
    %1359 = vmatprep.subr.bf16.mxu0 %v1343
    %1360 = vmatpush1.bf16.msra.mxu0 %v1342
    %1361 = vmatprep.subr.bf16.mxu0 %v1339
    %1362 = vmatpush1.bf16.msra.mxu0 %v1338
    %1363 = vmatprep.subr.bf16.mxu0 %v1335
    %1364 = vmatpush1.bf16.msra.mxu0 %v1334
    %1365 = vmatprep.subr.bf16.mxu0 %v1331
    %1366 = vmatpush1.bf16.msra.mxu0 %v1330
    %1367 = vmatprep.subr.bf16.mxu0 %v1327
    %1368 = vmatpush1.bf16.msra.mxu0 %v1326
    %1369 = vmatprep.subr.bf16.mxu0 %v1323
    %1370 = vmatpush1.bf16.msra.mxu0 %v1322
    %1371 = vmatprep.subr.bf16.mxu0 %v1319
    %1372 = vmatpush1.bf16.msra.mxu0 %v1318
    %1373 = vmatprep.subr.bf16.mxu0 0
    %1374 = vmatpush2.bf16.msra.mxu0 0
    %1375 = vmatprep.subr.bf16.mxu0 0
    %1376 = vmatpush2.bf16.msra.mxu0 0
    %1377 = vmatprep.subr.bf16.mxu0 0
    %1378 = vmatpush2.bf16.msra.mxu0 0
    %1379 = vmatprep.subr.bf16.mxu0 0
    %1380 = vmatpush2.bf16.msra.mxu0 0
    %1381 = vmatprep.subr.bf16.mxu0 0
    %1382 = vmatpush2.bf16.msra.mxu0 0
    %1383 = vmatprep.subr.bf16.mxu0 0
    %1384 = vmatpush2.bf16.msra.mxu0 0
    %1385 = vmatprep.subr.bf16.mxu0 0
    %1386 = vmatpush2.bf16.msra.mxu0 0
    %1387 = vmatprep.subr.bf16.mxu0 0
    %1388 = vmatpush2.bf16.msra.mxu0 0
    %1389 = vmatprep.mubr.bf16.mxu0 0
    %1390 = vmatmul.mubr.bf16.gmra.mxu0 %v1350
    %v1391 = vpop.f32.mrf.mxu0
    %v1392 = vadd.f32 %v1355, %v1391
    %v1393 = vpop.f32.mrf.mxu0
    %v1394 = vadd.f32 %v1355, %v1393
    %v1395 = vpop.f32.mrf.mxu0
    %v1396 = vpop.f32.mrf.mxu0
    %1397 = vdwg.mxu0
    %1398 = vmatprep.subr.bf16.mxu0 %v1349
    %1399 = vmatpush1.bf16.msra.mxu0 %v1348
    %1400 = vmatprep.subr.bf16.mxu0 %v1345
    %1401 = vmatpush1.bf16.msra.mxu0 %v1344
    %1402 = vmatprep.subr.bf16.mxu0 %v1341
    %1403 = vmatpush1.bf16.msra.mxu0 %v1340
    %1404 = vmatprep.subr.bf16.mxu0 %v1337
    %1405 = vmatpush1.bf16.msra.mxu0 %v1336
    %1406 = vmatprep.subr.bf16.mxu0 %v1333
    %1407 = vmatpush1.bf16.msra.mxu0 %v1332
    %1408 = vmatprep.subr.bf16.mxu0 %v1329
    %1409 = vmatpush1.bf16.msra.mxu0 %v1328
    %1410 = vmatprep.subr.bf16.mxu0 %v1325
    %1411 = vmatpush1.bf16.msra.mxu0 %v1324
    %1412 = vmatprep.subr.bf16.mxu0 %v1321
    %1413 = vmatpush1.bf16.msra.mxu0 %v1320
    %1414 = vmatprep.subr.bf16.mxu0 0
    %1415 = vmatpush2.bf16.msra.mxu0 0
    %1416 = vmatprep.subr.bf16.mxu0 0
    %1417 = vmatpush2.bf16.msra.mxu0 0
    %1418 = vmatprep.subr.bf16.mxu0 0
    %1419 = vmatpush2.bf16.msra.mxu0 0
    %1420 = vmatprep.subr.bf16.mxu0 0
    %1421 = vmatpush2.bf16.msra.mxu0 0
    %1422 = vmatprep.subr.bf16.mxu0 0
    %1423 = vmatpush2.bf16.msra.mxu0 0
    %1424 = vmatprep.subr.bf16.mxu0 0
    %1425 = vmatpush2.bf16.msra.mxu0 0
    %1426 = vmatprep.subr.bf16.mxu0 0
    %1427 = vmatpush2.bf16.msra.mxu0 0
    %1428 = vmatprep.subr.bf16.mxu0 0
    %1429 = vmatpush2.bf16.msra.mxu0 0
    %1430 = vmatprep.mubr.bf16.mxu0 0
    %1431 = vmatmul.mubr.bf16.gmra.mxu0 %v1350
    %v1432 = vpop.f32.mrf.mxu0
    %v1433 = vadd.f32 %v1355, %v1432
    %v1434 = vpop.f32.mrf.mxu0
    %v1435 = vadd.f32 %v1355, %v1434
    %v1436 = vpop.f32.mrf.mxu0
    %v1437 = vpop.f32.mrf.mxu0
    %1438 = vdwg.mxu0
    %v1439 = vadd.f32 %v1392, %v28
    %v1440 = vadd.f32 %v1394, %v29
    %v1441 = vadd.f32 %v1433, %v30
    %v1442 = vadd.f32 %v1435, %v31
    %v1447 = vcombine.low %v1439, %v1440
    %v1448 = vcombine.low %v1441, %v1442
    %1451 = vst [vmem:[#allocation2] sm:$0x77] %v1447
    %1452 = vst [vmem:[#allocation2 + $0x8] sm:$0x77] %v1448
    // Predicated region
    $region30: #{tpu_custom_call.1} parent=1 // pred_check
      _
    $region31: #{tpu_custom_call.1} parent=1 // pred_check_branch
      %1454 = sbr.rel (0) target = $region33
    $region32: #{tpu_custom_call.1} parent=1 // pred_region
      %s1456 = ssub.s32 256, 64
      %1457 = vsyncadd [#allocation3], %s1456
      %s1459 = sshll.u32 [#allocation2], 4
      %s1460 = int_to_ptr.vmem [resolvable:$true] %s1459
      %1462 = dma.vmem_to_hbm [thread:$0]  %s1460, 64, %s7, [#allocation3]
    $region33: #{tpu_custom_call.1} parent=1 // pred_fallthru
      _
    // Predicated region
    $region34: #{tpu_custom_call.1} parent=1 // pred_check
      _
    $region35: #{tpu_custom_call.1} parent=1 // pred_check_branch
      %1464 = sbr.rel (0) target = $region37
    $region36: #{tpu_custom_call.1} parent=1 // pred_region
      %1465 = dma.done [#allocation3], 256
    $region37: #{tpu_custom_call.1} parent=1 // pred_fallthru
      _
    %1466 = vsyncpa [#allocation3], 1

</llo_original>
